<compile_context>
chip_gen: v7x
topology: tpu7x:2x2x1
jax: 0.10.0
libtpu: 0.0.40
codegen_flags: <defaults>
</compile_context>

<pallas_src>
import functools

import jax
import jax.numpy as jnp
from jax import lax
from jax.experimental import pallas as pl
from jax.experimental.pallas import tpu as pltpu

LANES = 128       # lane-dense last dim (full vreg width)
SUBLANES = 8
TILE_ROWS = 1024  # (1024,128) f32 tile = 512 KiB/array; 6 arrays double-buffered
                  # ~6 MiB -> fits every generation's scoped-VMEM default
                  # (v5e 16 MiB, v6e/v7x 32 MiB) with room to spare.


def _fused_ph_kernel(*refs, delta, weights, n_rows, tile_rows, n_streams):
    """Masked pseudo-Huber accumulation over a shared 1-D row-tile grid.

    refs layout: (o_0, t_0, v_0, o_1, t_1, v_1, ...), loss_ref, acc_ref, cnt_ref
      o_s, t_s : (tile_rows, LANES) VMEM tiles, native float dtype
      v_s      : (tile_rows, LANES) VMEM tile, any integer dtype (nonzero == valid)
      loss_ref : (1, 1) f32 SMEM scalar output
      acc_ref, cnt_ref : (n_streams, 8, LANES) f32 VMEM accumulators
    """
    in_refs = refs[:3 * n_streams]
    loss_ref = refs[3 * n_streams]
    acc_ref = refs[3 * n_streams + 1]
    cnt_ref = refs[3 * n_streams + 2]

    i = pl.program_id(0)

    @pl.when(i == 0)
    def _init():
        acc_ref[...] = jnp.zeros_like(acc_ref)
        cnt_ref[...] = jnp.zeros_like(cnt_ref)

    # Only the last grid step can over-run the array (tile_rows does not have
    # to divide n_rows); OOB rows hold unspecified data, so mask them out.
    # `ragged` is static, so this code vanishes entirely when not needed.
    ragged = (n_rows % tile_rows) != 0
    if ragged:
        row = i * tile_rows + lax.broadcasted_iota(
            jnp.int32, (tile_rows, LANES), 0)
        in_bounds = row < n_rows

    inv_delta = 1.0 / delta
    delta2 = delta * delta

    for s in range(n_streams):
        o = in_refs[3 * s][...].astype(jnp.float32)
        t = in_refs[3 * s + 1][...].astype(jnp.float32)
        v = in_refs[3 * s + 2][...] != 0
        if ragged:
            v = jnp.logical_and(v, in_bounds)
        vf = v.astype(jnp.float32)

        # Residual is zeroed where invalid, so the pseudo-Huber term is exactly
        # 0 there (sqrt(1 + 0) - 1 == 0); no second mask / select needed.
        r = jnp.where(v, t - o, 0.0)
        rs = r * inv_delta
        term = delta2 * (jnp.sqrt(1.0 + rs * rs) - 1.0)

        # Fold the tile into one vreg-sized accumulator per stream: reshaping
        # (tile_rows,128) -> (tile_rows/8, 8, 128) is a no-op relayout and the
        # axis-0 sum is plain VPU adds (no cross-lane XLU work per step).
        acc_ref[s] += jnp.sum(term.reshape(-1, SUBLANES, LANES), axis=0)
        cnt_ref[s] += jnp.sum(vf.reshape(-1, SUBLANES, LANES), axis=0)

    @pl.when(i == pl.num_programs(0) - 1)
    def _finalize():
        total = jnp.float32(0.0)
        for s in range(n_streams):
            ssum = jnp.sum(acc_ref[s])
            scnt = jnp.sum(cnt_ref[s])
            # 0/0 -> nan when a stream has no valid pixels, matching
            # torch.mean over an empty gather in the reference module.
            total = total + jnp.float32(weights[s]) * (ssum / scnt)
        loss_ref[0, 0] = total


def _lane_dense(x):
    """Flatten and repack as (-1, LANES) with rows a multiple of 8.

    The reshape itself is free (row-major bitcast); a copy only happens when
    the flat size is not already a multiple of 8*128.
    """
    flat = jnp.reshape(x, (-1,))
    pad = (-flat.shape[0]) % (SUBLANES * LANES)
    if pad:
        flat = jnp.pad(flat, (0, pad))  # padding stays invalid (zeros)
    return flat.reshape(-1, LANES)


def fused_pseudo_huber(streams, delta=2.0):
    """streams: list of (output, target, valid, weight), all the same size.

    Returns sum_s weight_s * mean_over_valid(pseudo_huber(target_s - output_s))
    computed in a single Pallas launch.
    """
    packed, weights = [], []
    n_rows = None
    for out, tar, valid, w in streams:
        out = jnp.asarray(out)
        tar = jnp.asarray(tar)
        valid = jnp.asarray(valid)
        assert out.size == tar.size == valid.size
        if valid.dtype == jnp.bool_:
            valid = valid.astype(jnp.int8)  # avoid i1 refs; keep ints native

        o2 = _lane_dense(out)   # keep native dtype (bf16 ok)
        t2 = _lane_dense(tar)
        v2 = _lane_dense(valid)

        if n_rows is None:
            n_rows = o2.shape[0]
        assert o2.shape[0] == n_rows, "streams must have equal element counts"

        packed += [o2, t2, v2]
        weights.append(float(w))

    n_streams = len(weights)
    tile_rows = min(TILE_ROWS, n_rows)          # both multiples of 8
    grid = (pl.cdiv(n_rows, tile_rows),)

    kernel = functools.partial(
        _fused_ph_kernel,
        delta=float(delta),
        weights=tuple(weights),
        n_rows=n_rows,
        tile_rows=tile_rows,
        n_streams=n_streams,
    )

    in_specs = [pl.BlockSpec((tile_rows, LANES), lambda i: (i, 0))
                for _ in range(3 * n_streams)]

    loss = pl.pallas_call(
        kernel,
        out_shape=jax.ShapeDtypeStruct((1, 1), jnp.float32),
        grid=grid,
        in_specs=in_specs,
        out_specs=pl.BlockSpec(memory_space=pltpu.SMEM),
        scratch_shapes=[
            pltpu.VMEM((n_streams, SUBLANES, LANES), jnp.float32),
            pltpu.VMEM((n_streams, SUBLANES, LANES), jnp.float32),
        ],
        compiler_params=pltpu.CompilerParams(
            dimension_semantics=("arbitrary",)),
    )(*packed)
    return loss[0, 0]


def loss_forward(outputs, targets, epoch):
    """JAX/Pallas equivalent of Loss.forward (single fused launch)."""
    out_overhead, out_ground = outputs
    tar_ground, valid_ground, tar_overhead, valid_overhead = targets
    weight_overhead = 0.1 if epoch < 5 else 0.01

    # Flattening makes the PyTorch `.squeeze()` (dropping the channel-1 dim)
    # irrelevant: the flat element order of (B,1,H,W) and (B,H,W) is identical.
    streams = []
    if out_overhead is not None:
        streams.append((out_overhead, tar_overhead, valid_overhead, weight_overhead))
    if out_ground is not None:
        streams.append((out_ground, tar_ground, valid_ground, 1.0))
    if not streams:
        return jnp.float32(0.0)
    return fused_pseudo_huber(streams)


if __name__ == "__main__":
    key = jax.random.PRNGKey(0)
    k1, k2, k3, k4, k5, k6 = jax.random.split(key, 6)

    B, H, W = 2, 16, 16

    # Network outputs: NCHW with C=1 (squeezed inside the loss).
    out_overhead = jax.random.normal(k1, (B, 1, H, W), dtype=jnp.float32)
    out_ground = jax.random.normal(k2, (B, 1, H, W), dtype=jnp.float32)

    # Targets and validity masks.
    tar_overhead = jax.random.normal(k3, (B, H, W), dtype=jnp.float32)
    tar_ground = jax.random.normal(k4, (B, H, W), dtype=jnp.float32)
    valid_overhead = (jax.random.uniform(k5, (B, H, W)) > 0.3).astype(jnp.int32)
    valid_ground = (jax.random.uniform(k6, (B, H, W)) > 0.3).astype(jnp.int32)

    outputs = (out_overhead, out_ground)
    targets = (tar_ground, valid_ground, tar_overhead, valid_overhead)

    loss = loss_forward(outputs, targets, epoch=3)
    jax.block_until_ready(loss)

    # Pure-JAX reference check.
    def ref_ph(o, t, v, delta=2.0):
        o = jnp.squeeze(o, axis=1)
        v = v != 0
        r = jnp.where(v, t - o, 0.0)
        term = delta ** 2 * (jnp.sqrt(1.0 + (r / delta) ** 2) - 1.0)
        return jnp.sum(jnp.where(v, term, 0.0)) / jnp.sum(v)

    ref = 0.1 * ref_ph(out_overhead, tar_overhead, valid_overhead) + ref_ph(
        out_ground, tar_ground, valid_ground
    )
    assert jnp.allclose(loss, ref, rtol=1e-5, atol=1e-6), (loss, ref)

    print("KERNEL_OK")
</pallas_src>

<mosaic_0001>
module attributes {stable_mosaic.version = 11 : i64} {
  func.func @_fused_ph_kernel(%arg0: i32, %arg1: memref<8x128xf32, #tpu.memory_space<vmem>>, %arg2: memref<8x128xf32, #tpu.memory_space<vmem>>, %arg3: memref<8x128xi32, #tpu.memory_space<vmem>>, %arg4: memref<8x128xf32, #tpu.memory_space<vmem>>, %arg5: memref<8x128xf32, #tpu.memory_space<vmem>>, %arg6: memref<8x128xi32, #tpu.memory_space<vmem>>, %arg7: memref<1x1xf32, #tpu.memory_space<smem>>, %arg8: memref<2x8x128xf32, #tpu.memory_space<vmem>>, %arg9: memref<2x8x128xf32, #tpu.memory_space<vmem>>) attributes {dimension_semantics = [#tpu.dimension_semantics<arbitrary>], iteration_bounds = array<i64: 1>, scalar_prefetch = 0 : i64, scratch_operands = 2 : i64, tpu.core_type = #tpu.core_type<tc>, window_params = [{transform_indices = @transform_0, window_bounds = array<i64: 8, 128>}, {transform_indices = @transform_1, window_bounds = array<i64: 8, 128>}, {transform_indices = @transform_2, window_bounds = array<i64: 8, 128>}, {transform_indices = @transform_3, window_bounds = array<i64: 8, 128>}, {transform_indices = @transform_4, window_bounds = array<i64: 8, 128>}, {transform_indices = @transform_5, window_bounds = array<i64: 8, 128>}, {transform_indices = @transform_6, window_bounds = array<i64: 1, 1>}]} {
    %c0_i32 = arith.constant 0 : i32
    %0 = arith.cmpi eq, %arg0, %c0_i32 : i32
    %1 = arith.extui %0 : i1 to i32
    %c0_i32_0 = arith.constant 0 : i32
    %2 = arith.cmpi ne, %1, %c0_i32_0 : i32
    scf.if %2 {
      %cst_52 = arith.constant 0.000000e+00 : f32
      %78 = vector.broadcast %cst_52 : f32 to vector<2x8x128xf32>
      %c0_53 = arith.constant 0 : index
      %c0_54 = arith.constant 0 : index
      %c0_55 = arith.constant 0 : index
      %79 = vector.load %arg8[%c0_53, %c0_54, %c0_55] : memref<2x8x128xf32, #tpu.memory_space<vmem>>, vector<2x8x128xf32>
      tpu.vector_store %arg8[%c0_53, %c0_54, %c0_55], %78 {strides = array<i32>} : memref<2x8x128xf32, #tpu.memory_space<vmem>>, vector<2x8x128xf32>,
      %cst_56 = arith.constant 0.000000e+00 : f32
      %80 = vector.broadcast %cst_56 : f32 to vector<2x8x128xf32>
      %c0_57 = arith.constant 0 : index
      %c0_58 = arith.constant 0 : index
      %c0_59 = arith.constant 0 : index
      %81 = vector.load %arg9[%c0_57, %c0_58, %c0_59] : memref<2x8x128xf32, #tpu.memory_space<vmem>>, vector<2x8x128xf32>
      tpu.vector_store %arg9[%c0_57, %c0_58, %c0_59], %80 {strides = array<i32>} : memref<2x8x128xf32, #tpu.memory_space<vmem>>, vector<2x8x128xf32>,
    } else {
    }
    %c0 = arith.constant 0 : index
    %c0_1 = arith.constant 0 : index
    %3 = vector.load %arg1[%c0, %c0_1] : memref<8x128xf32, #tpu.memory_space<vmem>>, vector<8x128xf32>
    %c0_2 = arith.constant 0 : index
    %c0_3 = arith.constant 0 : index
    %4 = vector.load %arg2[%c0_2, %c0_3] : memref<8x128xf32, #tpu.memory_space<vmem>>, vector<8x128xf32>
    %c0_4 = arith.constant 0 : index
    %c0_5 = arith.constant 0 : index
    %5 = vector.load %arg3[%c0_4, %c0_5] : memref<8x128xi32, #tpu.memory_space<vmem>>, vector<8x128xi32>
    %c0_i32_6 = arith.constant 0 : i32
    %6 = vector.broadcast %c0_i32_6 : i32 to vector<8x128xi32>
    %7 = arith.cmpi ne, %5, %6 : vector<8x128xi32>
    %8 = arith.extui %7 : vector<8x128xi1> to vector<8x128xi32>
    %9 = arith.sitofp %8 : vector<8x128xi32> to vector<8x128xf32>
    %10 = arith.subf %4, %3 : vector<8x128xf32>
    %cst = arith.constant 0.000000e+00 : f32
    %11 = vector.broadcast %cst : f32 to vector<8x128xf32>
    %12 = arith.select %7, %10, %11 : vector<8x128xi1>, vector<8x128xf32>
    %cst_7 = arith.constant 5.000000e-01 : f32
    %13 = vector.broadcast %cst_7 : f32 to vector<8x128xf32>
    %14 = arith.mulf %12, %13 : vector<8x128xf32>
    %15 = arith.mulf %14, %14 : vector<8x128xf32>
    %cst_8 = arith.constant 1.000000e+00 : f32
    %16 = vector.broadcast %cst_8 : f32 to vector<8x128xf32>
    %17 = arith.addf %16, %15 : vector<8x128xf32>
    %18 = math.sqrt %17 : vector<8x128xf32>
    %cst_9 = arith.constant 1.000000e+00 : f32
    %19 = vector.broadcast %cst_9 : f32 to vector<8x128xf32>
    %20 = arith.subf %18, %19 : vector<8x128xf32>
    %cst_10 = arith.constant 4.000000e+00 : f32
    %21 = vector.broadcast %cst_10 : f32 to vector<8x128xf32>
    %22 = arith.mulf %21, %20 : vector<8x128xf32>
    %c0_11 = arith.constant 0 : index
    %c0_12 = arith.constant 0 : index
    %c0_13 = arith.constant 0 : index
    %23 = vector.load %arg8[%c0_11, %c0_12, %c0_13] : memref<2x8x128xf32, #tpu.memory_space<vmem>>, vector<1x8x128xf32>
    %24 = vector.shape_cast %23 : vector<1x8x128xf32> to vector<8x128xf32>
    %25 = vector.shape_cast %22 : vector<8x128xf32> to vector<1x8x128xf32>
    %cst_14 = arith.constant dense<0.000000e+00> : vector<8x128xf32>
    %26 = vector.multi_reduction <add>, %25, %cst_14 [0] : vector<1x8x128xf32> to vector<8x128xf32>
    %27 = arith.addf %24, %26 : vector<8x128xf32>
    %c0_15 = arith.constant 0 : index
    %c0_16 = arith.constant 0 : index
    %c0_17 = arith.constant 0 : index
    %28 = vector.load %arg8[%c0_15, %c0_16, %c0_17] : memref<2x8x128xf32, #tpu.memory_space<vmem>>, vector<1x8x128xf32>
    %29 = vector.shape_cast %28 : vector<1x8x128xf32> to vector<8x128xf32>
    %30 = vector.shape_cast %27 : vector<8x128xf32> to vector<1x8x128xf32>
    tpu.vector_store %arg8[%c0_15, %c0_16, %c0_17], %30 {strides = array<i32>} : memref<2x8x128xf32, #tpu.memory_space<vmem>>, vector<1x8x128xf32>,
    %c0_18 = arith.constant 0 : index
    %c0_19 = arith.constant 0 : index
    %c0_20 = arith.constant 0 : index
    %31 = vector.load %arg9[%c0_18, %c0_19, %c0_20] : memref<2x8x128xf32, #tpu.memory_space<vmem>>, vector<1x8x128xf32>
    %32 = vector.shape_cast %31 : vector<1x8x128xf32> to vector<8x128xf32>
    %33 = vector.shape_cast %9 : vector<8x128xf32> to vector<1x8x128xf32>
    %cst_21 = arith.constant dense<0.000000e+00> : vector<8x128xf32>
    %34 = vector.multi_reduction <add>, %33, %cst_21 [0] : vector<1x8x128xf32> to vector<8x128xf32>
    %35 = arith.addf %32, %34 : vector<8x128xf32>
    %c0_22 = arith.constant 0 : index
    %c0_23 = arith.constant 0 : index
    %c0_24 = arith.constant 0 : index
    %36 = vector.load %arg9[%c0_22, %c0_23, %c0_24] : memref<2x8x128xf32, #tpu.memory_space<vmem>>, vector<1x8x128xf32>
    %37 = vector.shape_cast %36 : vector<1x8x128xf32> to vector<8x128xf32>
    %38 = vector.shape_cast %35 : vector<8x128xf32> to vector<1x8x128xf32>
    tpu.vector_store %arg9[%c0_22, %c0_23, %c0_24], %38 {strides = array<i32>} : memref<2x8x128xf32, #tpu.memory_space<vmem>>, vector<1x8x128xf32>,
    %c0_25 = arith.constant 0 : index
    %c0_26 = arith.constant 0 : index
    %39 = vector.load %arg4[%c0_25, %c0_26] : memref<8x128xf32, #tpu.memory_space<vmem>>, vector<8x128xf32>
    %c0_27 = arith.constant 0 : index
    %c0_28 = arith.constant 0 : index
    %40 = vector.load %arg5[%c0_27, %c0_28] : memref<8x128xf32, #tpu.memory_space<vmem>>, vector<8x128xf32>
    %c0_29 = arith.constant 0 : index
    %c0_30 = arith.constant 0 : index
    %41 = vector.load %arg6[%c0_29, %c0_30] : memref<8x128xi32, #tpu.memory_space<vmem>>, vector<8x128xi32>
    %c0_i32_31 = arith.constant 0 : i32
    %42 = vector.broadcast %c0_i32_31 : i32 to vector<8x128xi32>
    %43 = arith.cmpi ne, %41, %42 : vector<8x128xi32>
    %44 = arith.extui %43 : vector<8x128xi1> to vector<8x128xi32>
    %45 = arith.sitofp %44 : vector<8x128xi32> to vector<8x128xf32>
    %46 = arith.subf %40, %39 : vector<8x128xf32>
    %cst_32 = arith.constant 0.000000e+00 : f32
    %47 = vector.broadcast %cst_32 : f32 to vector<8x128xf32>
    %48 = arith.select %43, %46, %47 : vector<8x128xi1>, vector<8x128xf32>
    %cst_33 = arith.constant 5.000000e-01 : f32
    %49 = vector.broadcast %cst_33 : f32 to vector<8x128xf32>
    %50 = arith.mulf %48, %49 : vector<8x128xf32>
    %51 = arith.mulf %50, %50 : vector<8x128xf32>
    %cst_34 = arith.constant 1.000000e+00 : f32
    %52 = vector.broadcast %cst_34 : f32 to vector<8x128xf32>
    %53 = arith.addf %52, %51 : vector<8x128xf32>
    %54 = math.sqrt %53 : vector<8x128xf32>
    %cst_35 = arith.constant 1.000000e+00 : f32
    %55 = vector.broadcast %cst_35 : f32 to vector<8x128xf32>
    %56 = arith.subf %54, %55 : vector<8x128xf32>
    %cst_36 = arith.constant 4.000000e+00 : f32
    %57 = vector.broadcast %cst_36 : f32 to vector<8x128xf32>
    %58 = arith.mulf %57, %56 : vector<8x128xf32>
    %c1 = arith.constant 1 : index
    %c0_37 = arith.constant 0 : index
    %c0_38 = arith.constant 0 : index
    %59 = vector.load %arg8[%c1, %c0_37, %c0_38] : memref<2x8x128xf32, #tpu.memory_space<vmem>>, vector<1x8x128xf32>
    %60 = vector.shape_cast %59 : vector<1x8x128xf32> to vector<8x128xf32>
    %61 = vector.shape_cast %58 : vector<8x128xf32> to vector<1x8x128xf32>
    %cst_39 = arith.constant dense<0.000000e+00> : vector<8x128xf32>
    %62 = vector.multi_reduction <add>, %61, %cst_39 [0] : vector<1x8x128xf32> to vector<8x128xf32>
    %63 = arith.addf %60, %62 : vector<8x128xf32>
    %c1_40 = arith.constant 1 : index
    %c0_41 = arith.constant 0 : index
    %c0_42 = arith.constant 0 : index
    %64 = vector.load %arg8[%c1_40, %c0_41, %c0_42] : memref<2x8x128xf32, #tpu.memory_space<vmem>>, vector<1x8x128xf32>
    %65 = vector.shape_cast %64 : vector<1x8x128xf32> to vector<8x128xf32>
    %66 = vector.shape_cast %63 : vector<8x128xf32> to vector<1x8x128xf32>
    tpu.vector_store %arg8[%c1_40, %c0_41, %c0_42], %66 {strides = array<i32>} : memref<2x8x128xf32, #tpu.memory_space<vmem>>, vector<1x8x128xf32>,
    %c1_43 = arith.constant 1 : index
    %c0_44 = arith.constant 0 : index
    %c0_45 = arith.constant 0 : index
    %67 = vector.load %arg9[%c1_43, %c0_44, %c0_45] : memref<2x8x128xf32, #tpu.memory_space<vmem>>, vector<1x8x128xf32>
    %68 = vector.shape_cast %67 : vector<1x8x128xf32> to vector<8x128xf32>
    %69 = vector.shape_cast %45 : vector<8x128xf32> to vector<1x8x128xf32>
    %cst_46 = arith.constant dense<0.000000e+00> : vector<8x128xf32>
    %70 = vector.multi_reduction <add>, %69, %cst_46 [0] : vector<1x8x128xf32> to vector<8x128xf32>
    %71 = arith.addf %68, %70 : vector<8x128xf32>
    %c1_47 = arith.constant 1 : index
    %c0_48 = arith.constant 0 : index
    %c0_49 = arith.constant 0 : index
    %72 = vector.load %arg9[%c1_47, %c0_48, %c0_49] : memref<2x8x128xf32, #tpu.memory_space<vmem>>, vector<1x8x128xf32>
    %73 = vector.shape_cast %72 : vector<1x8x128xf32> to vector<8x128xf32>
    %74 = vector.shape_cast %71 : vector<8x128xf32> to vector<1x8x128xf32>
    tpu.vector_store %arg9[%c1_47, %c0_48, %c0_49], %74 {strides = array<i32>} : memref<2x8x128xf32, #tpu.memory_space<vmem>>, vector<1x8x128xf32>,
    %c0_i32_50 = arith.constant 0 : i32
    %75 = arith.cmpi eq, %arg0, %c0_i32_50 : i32
    %76 = arith.extui %75 : i1 to i32
    %c0_i32_51 = arith.constant 0 : i32
    %77 = arith.cmpi ne, %76, %c0_i32_51 : i32
    scf.if %77 {
      %c0_52 = arith.constant 0 : index
      %c0_53 = arith.constant 0 : index
      %c0_54 = arith.constant 0 : index
      %78 = vector.load %arg8[%c0_52, %c0_53, %c0_54] : memref<2x8x128xf32, #tpu.memory_space<vmem>>, vector<1x8x128xf32>
      %79 = vector.shape_cast %78 : vector<1x8x128xf32> to vector<8x128xf32>
      %80 = vector.shape_cast %79 : vector<8x128xf32> to vector<1x8x128xf32>
      %cst_55 = arith.constant dense<0.000000e+00> : vector<1xf32>
      %81 = vector.multi_reduction <add>, %80, %cst_55 [1, 2] : vector<1x8x128xf32> to vector<1xf32>
      %82 = vector.shape_cast %81 : vector<1xf32> to vector<1x1x1xf32>
      %83 = vector.extract %82[0, 0, 0] : f32 from vector<1x1x1xf32>
      %c0_56 = arith.constant 0 : index
      %c0_57 = arith.constant 0 : index
      %c0_58 = arith.constant 0 : index
      %84 = vector.load %arg9[%c0_56, %c0_57, %c0_58] : memref<2x8x128xf32, #tpu.memory_space<vmem>>, vector<1x8x128xf32>
      %85 = vector.shape_cast %84 : vector<1x8x128xf32> to vector<8x128xf32>
      %86 = vector.shape_cast %85 : vector<8x128xf32> to vector<1x8x128xf32>
      %cst_59 = arith.constant dense<0.000000e+00> : vector<1xf32>
      %87 = vector.multi_reduction <add>, %86, %cst_59 [1, 2] : vector<1x8x128xf32> to vector<1xf32>
      %88 = vector.shape_cast %87 : vector<1xf32> to vector<1x1x1xf32>
      %89 = vector.extract %88[0, 0, 0] : f32 from vector<1x1x1xf32>
      %90 = arith.divf %83, %89 : f32
      %cst_60 = arith.constant 1.000000e-01 : f32
      %91 = arith.mulf %cst_60, %90 : f32
      %cst_61 = arith.constant 0.000000e+00 : f32
      %92 = arith.addf %cst_61, %91 : f32
      %c1_62 = arith.constant 1 : index
      %c0_63 = arith.constant 0 : index
      %c0_64 = arith.constant 0 : index
      %93 = vector.load %arg8[%c1_62, %c0_63, %c0_64] : memref<2x8x128xf32, #tpu.memory_space<vmem>>, vector<1x8x128xf32>
      %94 = vector.shape_cast %93 : vector<1x8x128xf32> to vector<8x128xf32>
      %95 = vector.shape_cast %94 : vector<8x128xf32> to vector<1x8x128xf32>
      %cst_65 = arith.constant dense<0.000000e+00> : vector<1xf32>
      %96 = vector.multi_reduction <add>, %95, %cst_65 [1, 2] : vector<1x8x128xf32> to vector<1xf32>
      %97 = vector.shape_cast %96 : vector<1xf32> to vector<1x1x1xf32>
      %98 = vector.extract %97[0, 0, 0] : f32 from vector<1x1x1xf32>
      %c1_66 = arith.constant 1 : index
      %c0_67 = arith.constant 0 : index
      %c0_68 = arith.constant 0 : index
      %99 = vector.load %arg9[%c1_66, %c0_67, %c0_68] : memref<2x8x128xf32, #tpu.memory_space<vmem>>, vector<1x8x128xf32>
      %100 = vector.shape_cast %99 : vector<1x8x128xf32> to vector<8x128xf32>
      %101 = vector.shape_cast %100 : vector<8x128xf32> to vector<1x8x128xf32>
      %cst_69 = arith.constant dense<0.000000e+00> : vector<1xf32>
      %102 = vector.multi_reduction <add>, %101, %cst_69 [1, 2] : vector<1x8x128xf32> to vector<1xf32>
      %103 = vector.shape_cast %102 : vector<1xf32> to vector<1x1x1xf32>
      %104 = vector.extract %103[0, 0, 0] : f32 from vector<1x1x1xf32>
      %105 = arith.divf %98, %104 : f32
      %cst_70 = arith.constant 1.000000e+00 : f32
      %106 = arith.mulf %cst_70, %105 : f32
      %107 = arith.addf %92, %106 : f32
      %c0_71 = arith.constant 0 : index
      %c0_72 = arith.constant 0 : index
      %108 = memref.load %arg7[%c0_71, %c0_72] : memref<1x1xf32, #tpu.memory_space<smem>>
      memref.store %107, %arg7[%c0_71, %c0_72] : memref<1x1xf32, #tpu.memory_space<smem>>
    } else {
    }
    return
  }
  func.func @transform_0(%arg0: i32) -> (i32, i32) {
    %c0_i32 = arith.constant 0 : i32
    %c0_i32_0 = arith.constant 0 : i32
    return %arg0, %c0_i32 : i32, i32
  }
  func.func @transform_1(%arg0: i32) -> (i32, i32) {
    %c0_i32 = arith.constant 0 : i32
    %c0_i32_0 = arith.constant 0 : i32
    return %arg0, %c0_i32 : i32, i32
  }
  func.func @transform_2(%arg0: i32) -> (i32, i32) {
    %c0_i32 = arith.constant 0 : i32
    %c0_i32_0 = arith.constant 0 : i32
    return %arg0, %c0_i32 : i32, i32
  }
  func.func @transform_3(%arg0: i32) -> (i32, i32) {
    %c0_i32 = arith.constant 0 : i32
    %c0_i32_0 = arith.constant 0 : i32
    return %arg0, %c0_i32 : i32, i32
  }
  func.func @transform_4(%arg0: i32) -> (i32, i32) {
    %c0_i32 = arith.constant 0 : i32
    %c0_i32_0 = arith.constant 0 : i32
    return %arg0, %c0_i32 : i32, i32
  }
  func.func @transform_5(%arg0: i32) -> (i32, i32) {
    %c0_i32 = arith.constant 0 : i32
    %c0_i32_0 = arith.constant 0 : i32
    return %arg0, %c0_i32 : i32, i32
  }
  func.func @transform_6(%arg0: i32) -> (i32, i32) {
    %c0_i32 = arith.constant 0 : i32
    %c0_i32_0 = arith.constant 0 : i32
    %c0_i32_1 = arith.constant 0 : i32
    return %c0_i32, %c0_i32_0 : i32, i32
  }
}

</mosaic_0001>

<llo_original>
// kernel: tpu_custom_call.1
$region0: #{tpu_custom_call.1}
  #allocation0 [shape = 'u32[]', space=smem, size = 0x4, offset = 0x4, fixed_abs, tag = 'smem constant byte address 0x4 - core index']
  #allocation1 [shape = 'u32[144,128]{1,0:T(1,128)}', space=vmem, size = 0x12000, scoped, tag = 'internal scratch']
  #allocation2 [shape = 'f32[2,8,128]{2,1,0:T(8,128)}', space=vmem, size = 0x2000, scoped, tag = 'scratch operand']
  #allocation3 [shape = 'f32[2,8,128]{2,1,0:T(8,128)}', space=vmem, size = 0x2000, scoped, tag = 'scratch operand']
  %s0 = inlined_call_operand.hbm [shape: f32[8,128], index: 0, kind: input, shape index: {}]
  %s1 = inlined_call_operand.hbm [shape: f32[8,128], index: 1, kind: input, shape index: {}]
  %s2 = inlined_call_operand.hbm [shape: s32[8,128], index: 2, kind: input, shape index: {}]
  %s3 = inlined_call_operand.vmem [shape: f32[8,128], index: 3, kind: input, shape index: {}]
  %s4 = inlined_call_operand.hbm [shape: f32[8,128], index: 4, kind: input, shape index: {}]
  %s5 = inlined_call_operand.vmem [shape: s32[8,128], index: 5, kind: input, shape index: {}]
  %s6 = inlined_call_operand.hbm [shape: f32[1,1], index: 6, kind: output, shape index: {}]
  %s7 = sld [smem:[#allocation0]]
  $region58: #{tpu_custom_call.1} parent=0
    _
  %s9 = ssub.s32 1, %s7
  %s10 = scalar_select 0, %s9, %s7
  $region1: #{tpu_custom_call.1} parent=0
    #allocation4 [shape = 'u8[4096]{0}', space=vmem, size = 0x1000, scoped, tag = 'input window, operand 0, single buffered']
    #allocation5 [shape = 's32[1]{0}', space=sflag, size = 0x4, scoped, tag = 'scoped memory for tpu_custom_call.1']
    #allocation6 [shape = 's32[1]{0}', space=sflag, size = 0x4, scoped, tag = 'scoped memory for tpu_custom_call.1']
    #allocation7 [shape = 'u8[4096]{0}', space=vmem, size = 0x1000, scoped, tag = 'input window, operand 1, single buffered']
    #allocation8 [shape = 's32[1]{0}', space=sflag, size = 0x4, scoped, tag = 'scoped memory for tpu_custom_call.1']
    #allocation9 [shape = 'u8[4096]{0}', space=vmem, size = 0x1000, scoped, tag = 'input window, operand 2, single buffered']
    #allocation10 [shape = 'u8[4096]{0}', space=vmem, size = 0x1000, scoped, tag = 'input window, operand 4, single buffered']
    #allocation11 [shape = 's32[1]{0}', space=sflag, size = 0x4, scoped, tag = 'scoped memory for tpu_custom_call.1']
    #allocation12 [shape = 'u8[512]{0}', space=smem, size = 0x200, scoped, tag = 'output window, operand 0, single buffered']
    %11 = vsyncpa [#allocation5], 0
    %12 = vsyncpa [#allocation8], 0
    %13 = vsyncpa [#allocation11], 0
    %14 = vsyncpa [#allocation6], 0
    // Predicated region
    $region2: #{tpu_custom_call.1} parent=1 // pred_check
      _
    $region3: #{tpu_custom_call.1} parent=1 // pred_check_branch
      %16 = sbr.rel (0) target = $region5
    $region4: #{tpu_custom_call.1} parent=1 // pred_region
      %s18 = ssub.s32 128, 128
      %19 = vsyncadd [#allocation5], %s18
      %s21 = sshll.u32 [#allocation4], 4
      %s22 = int_to_ptr.vmem [resolvable:$true] %s21
      %24 = dma.hbm_to_vmem [thread:$0]  %s0, 128, %s22, [#allocation5]
    $region5: #{tpu_custom_call.1} parent=1 // pred_fallthru
      _
    // Predicated region
    $region6: #{tpu_custom_call.1} parent=1 // pred_check
      _
    $region7: #{tpu_custom_call.1} parent=1 // pred_check_branch
      %26 = sbr.rel (0) target = $region9
    $region8: #{tpu_custom_call.1} parent=1 // pred_region
      %s28 = ssub.s32 128, 128
      %29 = vsyncadd [#allocation8], %s28
      %s31 = sshll.u32 [#allocation7], 4
      %s32 = int_to_ptr.vmem [resolvable:$true] %s31
      %34 = dma.hbm_to_vmem [thread:$0]  %s1, 128, %s32, [#allocation8]
    $region9: #{tpu_custom_call.1} parent=1 // pred_fallthru
      _
    // Predicated region
    $region10: #{tpu_custom_call.1} parent=1 // pred_check
      _
    $region11: #{tpu_custom_call.1} parent=1 // pred_check_branch
      %36 = sbr.rel (0) target = $region13
    $region12: #{tpu_custom_call.1} parent=1 // pred_region
      %s38 = ssub.s32 128, 128
      %39 = vsyncadd [#allocation8], %s38
      %s41 = sshll.u32 [#allocation9], 4
      %s42 = int_to_ptr.vmem [resolvable:$true] %s41
      %44 = dma.hbm_to_vmem [thread:$0]  %s2, 128, %s42, [#allocation8]
    $region13: #{tpu_custom_call.1} parent=1 // pred_fallthru
      _
    // Predicated region
    $region14: #{tpu_custom_call.1} parent=1 // pred_check
      _
    $region15: #{tpu_custom_call.1} parent=1 // pred_check_branch
      %46 = sbr.rel (0) target = $region17
    $region16: #{tpu_custom_call.1} parent=1 // pred_region
      _
    $region17: #{tpu_custom_call.1} parent=1 // pred_fallthru
      _
    // Predicated region
    $region18: #{tpu_custom_call.1} parent=1 // pred_check
      _
    $region19: #{tpu_custom_call.1} parent=1 // pred_check_branch
      %48 = sbr.rel (0) target = $region21
    $region20: #{tpu_custom_call.1} parent=1 // pred_region
      %s50 = ssub.s32 128, 128
      %51 = vsyncadd [#allocation11], %s50
      %s53 = sshll.u32 [#allocation10], 4
      %s54 = int_to_ptr.vmem [resolvable:$true] %s53
      %56 = dma.hbm_to_vmem [thread:$0]  %s4, 128, %s54, [#allocation11]
    $region21: #{tpu_custom_call.1} parent=1 // pred_fallthru
      _
    // Predicated region
    $region22: #{tpu_custom_call.1} parent=1 // pred_check
      _
    $region23: #{tpu_custom_call.1} parent=1 // pred_check_branch
      %58 = sbr.rel (0) target = $region25
    $region24: #{tpu_custom_call.1} parent=1 // pred_region
      _
    $region25: #{tpu_custom_call.1} parent=1 // pred_fallthru
      _
    // Predicated region
    $region26: #{tpu_custom_call.1} parent=1 // pred_check
      _
    $region27: #{tpu_custom_call.1} parent=1 // pred_check_branch
      %60 = sbr.rel (0) target = $region29
    $region28: #{tpu_custom_call.1} parent=1 // pred_region
      %61 = dma.done [#allocation5], 128
    $region29: #{tpu_custom_call.1} parent=1 // pred_fallthru
      _
    // Predicated region
    $region30: #{tpu_custom_call.1} parent=1 // pred_check
      _
    $region31: #{tpu_custom_call.1} parent=1 // pred_check_branch
      %63 = sbr.rel (0) target = $region33
    $region32: #{tpu_custom_call.1} parent=1 // pred_region
      %64 = dma.done [#allocation8], 128
    $region33: #{tpu_custom_call.1} parent=1 // pred_fallthru
      _
    // Predicated region
    $region34: #{tpu_custom_call.1} parent=1 // pred_check
      _
    $region35: #{tpu_custom_call.1} parent=1 // pred_check_branch
      %66 = sbr.rel (0) target = $region37
    $region36: #{tpu_custom_call.1} parent=1 // pred_region
      %67 = dma.done [#allocation8], 128
    $region37: #{tpu_custom_call.1} parent=1 // pred_fallthru
      _
    // Predicated region
    $region38: #{tpu_custom_call.1} parent=1 // pred_check
      _
    $region39: #{tpu_custom_call.1} parent=1 // pred_check_branch
      %69 = sbr.rel (0) target = $region41
    $region40: #{tpu_custom_call.1} parent=1 // pred_region
      %70 = dma.done [#allocation11], 128
    $region41: #{tpu_custom_call.1} parent=1 // pred_fallthru
      _
    %p71 = scmp.eq.s32.totalorder 0, 0
    // Predicated region
    $region42: #{tpu_custom_call.1} parent=1 // pred_check
      %p72 = pneg %p71
    $region43: #{tpu_custom_call.1} parent=1 // pred_check_branch
      %74 = sbr.rel (%p72) target = $region45
    $region44: #{tpu_custom_call.1} parent=1 // pred_region
      %75 = vst [vmem:[#allocation2] sm:$0xff] 0.0
      %76 = vst [vmem:[#allocation2 + $0x8] sm:$0xff] 0.0
      %77 = vst [vmem:[#allocation3] sm:$0xff] 0.0
      %78 = vst [vmem:[#allocation3 + $0x8] sm:$0xff] 0.0
    $region45: #{tpu_custom_call.1} parent=1 // pred_fallthru
      _
    %v79 = vld [vmem:[#allocation4] sm:$0xff]
    %v80 = vld [vmem:[#allocation7] sm:$0xff]
    %v81 = vld [vmem:[#allocation9] sm:$0xff]
    %vm82 = vcmp.ne.s32.totalorder %v81, 0
    %v83 = vsel %vm82, 1, 0
    %v84 = vcvt.s32.f32 %v83
    %v85 = vsub.f32 %v80, %v79
    %v86 = vsel %vm82, %v85, 0.0
    %v87 = vmul.f32 %v86, 0.5
    %v88 = vmul.f32 %v87, %v87
    %v89 = vadd.f32 %v88, 1.0
    %v90 = vrsqrt.pop %v89
    %v91 = vmul.f32 %v89, %v90
    %vm92 = vcmp.eq.f32.partialorder %v89, inf
    %v93 = vsel %vm92, %v89, %v91
    %vm94 = vcmp.eq.f32.partialorder %v89, 0.0
    %v95 = vand.u32 %v89, 2147483648
    %v96 = vsel %vm94, %v95, %v93
    %v97 = vsub.f32 %v96, 1.0
    %v98 = vmul.f32 %v97, 4.0
    %v99 = vld [vmem:[#allocation2] sm:$0xff]
    %v100 = vadd.f32 %v98, 0.0
    %v101 = vadd.f32 %v99, %v100
    %102 = vst [vmem:[#allocation2] sm:$0xff] %v101
    %v103 = vld [vmem:[#allocation3] sm:$0xff]
    %v104 = vadd.f32 %v84, 0.0
    %v105 = vadd.f32 %v103, %v104
    %106 = vst [vmem:[#allocation3] sm:$0xff] %v105
    %v107 = vld [vmem:[%s3] sm:$0xff]
    %v108 = vld [vmem:[#allocation10] sm:$0xff]
    %v109 = vld [vmem:[%s5] sm:$0xff]
    %vm110 = vcmp.ne.s32.totalorder %v109, 0
    %v111 = vsel %vm110, 1, 0
    %v112 = vcvt.s32.f32 %v111
    %v113 = vsub.f32 %v108, %v107
    %v114 = vsel %vm110, %v113, 0.0
    %v115 = vmul.f32 %v114, 0.5
    %v116 = vmul.f32 %v115, %v115
    %v117 = vadd.f32 %v116, 1.0
    %v118 = vrsqrt.pop %v117
    %v119 = vmul.f32 %v117, %v118
    %vm120 = vcmp.eq.f32.partialorder %v117, inf
    %v121 = vsel %vm120, %v117, %v119
    %vm122 = vcmp.eq.f32.partialorder %v117, 0.0
    %v123 = vand.u32 %v117, 2147483648
    %v124 = vsel %vm122, %v123, %v121
    %v125 = vsub.f32 %v124, 1.0
    %v126 = vmul.f32 %v125, 4.0
    %s127 = scalar_lea.vmem [#allocation2], 8
    %v128 = vld [vmem:[%s127] sm:$0xff]
    %v129 = vadd.f32 %v126, 0.0
    %v130 = vadd.f32 %v128, %v129
    %131 = vst [vmem:[%s127] sm:$0xff] %v130
    %s132 = scalar_lea.vmem [#allocation3], 8
    %v133 = vld [vmem:[%s132] sm:$0xff]
    %v134 = vadd.f32 %v112, 0.0
    %v135 = vadd.f32 %v133, %v134
    %136 = vst [vmem:[%s132] sm:$0xff] %v135
    // Predicated region
    $region46: #{tpu_custom_call.1} parent=1 // pred_check
      %p137 = pneg %p71
    $region47: #{tpu_custom_call.1} parent=1 // pred_check_branch
      %139 = sbr.rel (%p137) target = $region49
    $region48: #{tpu_custom_call.1} parent=1 // pred_region
      %v140 = vld [vmem:[#allocation2] sm:$0xff]
      %141 = vadd.xlane.f32.xlu0 %v140
      %v142 = vpop.xlane.xlu0 %141
      %v143 = vrot.slane %v142, 4
      %v144 = vadd.f32 %v142, %v143
      %v145 = vrot.slane %v144, 2
      %v146 = vadd.f32 %v144, %v145
      %v147 = vrot.slane %v146, 1
      %v148 = vadd.f32 %v146, %v147
      %s149 = vtos %v148
      %v150 = vld [vmem:[#allocation3] sm:$0xff]
      %151 = vadd.xlane.f32.xlu0 %v150
      %v152 = vpop.xlane.xlu0 %151
      %v153 = vrot.slane %v152, 4
      %v154 = vadd.f32 %v152, %v153
      %v155 = vrot.slane %v154, 2
      %v156 = vadd.f32 %v154, %v155
      %v157 = vrot.slane %v156, 1
      %v158 = vadd.f32 %v156, %v157
      %s159 = vtos %v158
      %v160 = vstv %s159
      %v161 = vrcp.pop %v160
      %s162 = vtos %v161
      %s163 = smul.f32 %s149, %s162
      %s164 = smul.f32 %s163, 0.1
      %s165 = sadd.f32 %s164, 0.0
      %v166 = vld [vmem:[%s127] sm:$0xff]
      %167 = vadd.xlane.f32.xlu0 %v166
      %v168 = vpop.xlane.xlu0 %167
      %v169 = vrot.slane %v168, 4
      %v170 = vadd.f32 %v168, %v169
      %v171 = vrot.slane %v170, 2
      %v172 = vadd.f32 %v170, %v171
      %v173 = vrot.slane %v172, 1
      %v174 = vadd.f32 %v172, %v173
      %s175 = vtos %v174
      %v176 = vld [vmem:[%s132] sm:$0xff]
      %177 = vadd.xlane.f32.xlu0 %v176
      %v178 = vpop.xlane.xlu0 %177
      %v179 = vrot.slane %v178, 4
      %v180 = vadd.f32 %v178, %v179
      %v181 = vrot.slane %v180, 2
      %v182 = vadd.f32 %v180, %v181
      %v183 = vrot.slane %v182, 1
      %v184 = vadd.f32 %v182, %v183
      %s185 = vtos %v184
      %v186 = vstv %s185
      %v187 = vrcp.pop %v186
      %s188 = vtos %v187
      %s189 = smul.f32 %s175, %s188
      %s190 = sadd.f32 %s165, %s189
      %s191 = scalar_lea.smem [#allocation12], 0
      %192 = sst [smem:[%s191]] %s190
    $region49: #{tpu_custom_call.1} parent=1 // pred_fallthru
      _
    // Predicated region
    $region50: #{tpu_custom_call.1} parent=1 // pred_check
      _
    $region51: #{tpu_custom_call.1} parent=1 // pred_check_branch
      %194 = sbr.rel (0) target = $region53
    $region52: #{tpu_custom_call.1} parent=1 // pred_region
      %s196 = ssub.s32 16, 16
      %197 = vsyncadd [#allocation6], %s196
      %200 = dma.smem_to_hbm [#allocation12], 16, %s6, [#allocation6]
    $region53: #{tpu_custom_call.1} parent=1 // pred_fallthru
      _
    // Predicated region
    $region54: #{tpu_custom_call.1} parent=1 // pred_check
      _
    $region55: #{tpu_custom_call.1} parent=1 // pred_check_branch
      %202 = sbr.rel (0) target = $region57
    $region56: #{tpu_custom_call.1} parent=1 // pred_region
      %203 = dma.done [#allocation6], 16
    $region57: #{tpu_custom_call.1} parent=1 // pred_fallthru
      _
    %204 = sfence
    %205 = vsyncpa [#allocation5], 1
    %206 = vsyncpa [#allocation8], 1
    %207 = vsyncpa [#allocation11], 1
    %208 = vsyncpa [#allocation6], 1

</llo_original>
